<compile_context>
chip_gen: v6e
topology: v6e:2x2x1
jax: 0.10.0
libtpu: 0.0.40
codegen_flags: <defaults>
</compile_context>

<pallas_src>
import numpy as np
import jax
import jax.numpy as jnp
from jax.experimental import pallas as pl
from jax.experimental.pallas import tpu as pltpu


def _round_up(x, m):
    return ((x + m - 1) // m) * m


def _adaptive_pool_membership(H, W, p):
    """0/1 membership matrix M[(i*p+j), h*W+w] plus per-bin inverse areas.

    Bin edges follow nn.AdaptiveAvgPool2d exactly:
      start = floor(i*H/p), end = ceil((i+1)*H/p)   (bins may overlap / be uneven).
    """
    m = np.zeros((p * p, H * W), dtype=np.float32)
    inv_area = np.zeros((p * p,), dtype=np.float32)
    for i in range(p):
        h0 = (i * H) // p
        h1 = -((-(i + 1) * H) // p)
        for j in range(p):
            w0 = (j * W) // p
            w1 = -((-(j + 1) * W) // p)
            k = i * p + j
            inv_area[k] = 1.0 / float((h1 - h0) * (w1 - w0))
            for h in range(h0, h1):
                m[k, h * W + w0:h * W + w1] = 1.0
    return m, inv_area


def _make_mxu_kernel(pp):
    """Pool (MXU) + fc (MXU) with an f32 accumulator over channel tiles."""

    def kernel(x_ref, pt_ref, w_ref, b_ref, o_ref, acc_ref):
        c_idx = pl.program_id(1)

        @pl.when(c_idx == 0)
        def _():
            acc_ref[...] = jnp.zeros_like(acc_ref)

        x_t = x_ref[...]                                            # (Bt, HW, Ct) compute dtype
        bt = x_t.shape[0]
        ptb = jnp.broadcast_to(pt_ref[...][None, :, :],
                               (bt,) + tuple(pt_ref.shape))         # (Bt, pp, HW)
        # Exact bin-sum pooling on the MXU (0/1 matrix), f32 accumulation.
        pooled = jnp.einsum('bkh,bhc->bkc', ptb, x_t,
                            preferred_element_type=jnp.float32)     # (Bt, pp, Ct) f32
        pooled = pooled.astype(x_t.dtype)                           # bf16 MXU path for the fc

        acc = acc_ref[...]
        for k in range(pp):                                         # static unroll, pp small
            acc = acc + jnp.dot(pooled[:, k, :], w_ref[k],
                                preferred_element_type=jnp.float32)  # (Bt, Np) f32
        acc_ref[...] = acc

        @pl.when(c_idx == pl.num_programs(1) - 1)
        def _():
            o_ref[...] = (acc_ref[...] + b_ref[...]).astype(o_ref.dtype)

    return kernel


def _make_vpu_kernel(pp, n_classes):
    """Pool (MXU) + tiny fc as VPU multiply + reductions (no 128x-padded weight)."""

    def kernel(x_ref, pt_ref, w_ref, b_ref, o_ref, acc_ref):
        c_idx = pl.program_id(1)

        @pl.when(c_idx == 0)
        def _():
            acc_ref[...] = jnp.zeros_like(acc_ref)

        x_t = x_ref[...]                                            # (Bt, HW, Ct)
        bt = x_t.shape[0]
        ptb = jnp.broadcast_to(pt_ref[...][None, :, :],
                               (bt,) + tuple(pt_ref.shape))         # (Bt, pp, HW)
        pooled = jnp.einsum('bkh,bhc->bkc', ptb, x_t,
                            preferred_element_type=jnp.float32)     # (Bt, pp, Ct) f32

        cols = []
        for n in range(n_classes):                                  # n_classes is tiny here
            wn = w_ref[n].astype(jnp.float32)                       # (pp, Ct)
            s = (pooled * wn[None, :, :]).sum(axis=2).sum(axis=1, keepdims=True)  # (Bt, 1)
            cols.append(s)
        contrib = cols[0] if n_classes == 1 else jnp.concatenate(cols, axis=-1)
        acc_ref[...] += contrib

        @pl.when(c_idx == pl.num_programs(1) - 1)
        def _():
            o_ref[...] = (acc_ref[...] + b_ref[...]).astype(o_ref.dtype)

    return kernel


def basic_decoder(x, weight, bias, *, pool_output_size=2,
                  compute_dtype=jnp.bfloat16, small_class_threshold=8):
    """x: (B, C, H, W); weight: (n_classes, C*p*p); bias: (n_classes,) -> (B, n_classes)."""
    B, C, H, W = x.shape
    p = int(pool_output_size)
    pp = p * p
    n_classes = weight.shape[0]
    assert weight.shape[1] == C * pp, "fc weight must have C * pool^2 input features"
    HW = H * W
    out_dtype = x.dtype
    cdtype = compute_dtype
    itemsize = np.dtype(cdtype).itemsize
    out_itemsize = np.dtype(out_dtype).itemsize

    # ---------- host-side layout plumbing (exact algebraic rearrangement only) ----------
    # channels-last activations: xr[b, h*W+w, c] = x[b, c, h, w]  (channels on the 128 lanes)
    xr = jnp.transpose(x, (0, 2, 3, 1)).reshape(B, HW, C).astype(cdtype)

    # 0/1 bin membership (exact in bf16); 1/area folded into the fc weight below (in f32)
    m_np, inv_area_np = _adaptive_pool_membership(H, W, p)
    pt = jnp.asarray(m_np, dtype=cdtype)                            # (pp, HW)
    inv_area = jnp.asarray(inv_area_np, dtype=jnp.float32)

    w_f32 = weight.astype(jnp.float32)
    b_f32 = bias.astype(jnp.float32)

    C_pad = _round_up(C, 128)
    if C_pad != C:
        xr = jnp.pad(xr, ((0, 0), (0, 0), (0, C_pad - C)))

    small_n = n_classes <= small_class_threshold

    if small_n:
        # wv[n, k, c] = weight[n, c*pp + k] / bin_area[k]
        wv = jnp.transpose(w_f32.reshape(n_classes, C, pp), (0, 2, 1)) * inv_area[None, :, None]
        if C_pad != C:
            wv = jnp.pad(wv, ((0, 0), (0, 0), (0, C_pad - C)))
        w_dev = wv.astype(cdtype)                                   # (n_classes, pp, C_pad)
        bias_dev = b_f32.reshape(1, n_classes)                      # stays f32
        n_cols = n_classes
        w_per_c = n_classes * pp * itemsize
    else:
        # Lane-dense class dim (unmasked output stores), padded to a multiple of 128.
        Np = _round_up(n_classes, 128)
        # w3[k, c, n] = weight[n, c*pp + k] / bin_area[k]
        w3 = jnp.transpose(w_f32.reshape(n_classes, C, pp), (2, 1, 0)) * inv_area[:, None, None]
        w3 = jnp.pad(w3, ((0, 0), (0, C_pad - C), (0, Np - n_classes)))
        w_dev = w3.astype(cdtype)                                   # (pp, C_pad, Np)
        bias_dev = jnp.pad(b_f32, (0, Np - n_classes)).reshape(1, Np)
        n_cols = Np
        w_per_c = pp * Np * itemsize

    # ---------- VMEM-aware tile selection ----------
    try:
        vmem_cap = int(pltpu.get_tpu_info().vmem_capacity_bytes)
    except Exception:
        vmem_cap = 64 * 1024 * 1024        # conservative (v7x per-TensorCore VMEM)
    budget = int(vmem_cap * 0.6)

    def _fits(bt, ct):
        x_tile = bt * HW * ct * itemsize
        w_tile = w_per_c * ct
        out_tile = bt * n_cols * out_itemsize
        resident = pp * HW * itemsize + n_cols * 4 + bt * n_cols * 4   # pt + bias + f32 acc
        return 2 * (x_tile + w_tile + out_tile) + resident <= budget

    if B <= 256:
        bt_candidates = [B] + [b for b in (128, 64, 32, 16, 8) if b < B]
    else:
        bt_candidates = [256, 128, 64, 32, 16, 8]

    n128 = C_pad // 128
    chosen = None
    for bt in bt_candidates:
        for d in range(1, n128 + 1):                # d = number of channel (reduction) steps
            if n128 % d != 0:
                continue
            ct = C_pad // d
            if _fits(bt, ct):
                chosen = (bt, ct)
                break
        if chosen is not None:
            break
    if chosen is None:
        chosen = (bt_candidates[-1], 128)
    Bt, Ct = chosen
    B_pad = _round_up(B, Bt)
    if B_pad != B:
        xr = jnp.pad(xr, ((0, B_pad - B), (0, 0), (0, 0)))

    need = (2 * (Bt * HW * Ct * itemsize + w_per_c * Ct + Bt * n_cols * out_itemsize)
            + pp * HW * itemsize + n_cols * 4 + Bt * n_cols * 4)
    vmem_limit = int(min(max(2 * need, 32 * 1024 * 1024), int(vmem_cap * 0.9)))

    grid = (B_pad // Bt, C_pad // Ct)               # (parallel batch, reduction over channels)
    kernel = _make_vpu_kernel(pp, n_classes) if small_n else _make_mxu_kernel(pp)

    out = pl.pallas_call(
        kernel,
        out_shape=jax.ShapeDtypeStruct((B_pad, n_cols), out_dtype),
        grid_spec=pltpu.PrefetchScalarGridSpec(
            num_scalar_prefetch=0,
            grid=grid,
            in_specs=[
                pl.BlockSpec((Bt, HW, Ct), lambda b, c: (b, 0, c)),          # activations
                pl.BlockSpec((pp, HW), lambda b, c: (0, 0)),                 # pooling matrix (resident)
                (pl.BlockSpec((n_classes, pp, Ct), lambda b, c: (0, 0, c)) if small_n
                 else pl.BlockSpec((pp, Ct, n_cols), lambda b, c: (0, c, 0))),  # fc weight tile
                pl.BlockSpec((1, n_cols), lambda b, c: (0, 0)),              # bias (resident, f32)
            ],
            out_specs=pl.BlockSpec((Bt, n_cols), lambda b, c: (b, 0)),
            scratch_shapes=[pltpu.VMEM((Bt, n_cols), jnp.float32)],          # f32 accumulator
        ),
        compiler_params=pltpu.CompilerParams(
            dimension_semantics=("parallel", "arbitrary"),
            vmem_limit_bytes=vmem_limit),
    )(xr, pt, w_dev, bias_dev)

    return out[:B, :n_classes]


def basic_decoder_ref(x, weight, bias, pool_output_size=2):
    """Pure numpy reference (general adaptive bins, float64)."""
    x_np = np.asarray(jax.device_get(x), dtype=np.float64)
    w_np = np.asarray(jax.device_get(weight), dtype=np.float64)
    b_np = np.asarray(jax.device_get(bias), dtype=np.float64)
    B, C, H, W = x_np.shape
    p = pool_output_size
    pooled = np.zeros((B, C, p, p), dtype=np.float64)
    for i in range(p):
        h0, h1 = (i * H) // p, -((-(i + 1) * H) // p)
        for j in range(p):
            w0, w1 = (j * W) // p, -((-(j + 1) * W) // p)
            pooled[:, :, i, j] = x_np[:, :, h0:h1, w0:w1].mean(axis=(2, 3))
    return pooled.reshape(B, -1) @ w_np.T + b_np


if __name__ == "__main__":
    key = jax.random.PRNGKey(0)

    # --- config 1: module defaults (pool=2, n_classes=1, output_dimension=512) -> VPU fc path ---
    B, C, H, W, p, n = 2, 512, 16, 16, 2, 1
    k1, k2, k3, key = jax.random.split(key, 4)
    x = jax.random.normal(k1, (B, C, H, W), dtype=jnp.float32)
    w = jax.random.normal(k2, (n, C * p * p), dtype=jnp.float32) * 0.05
    b = jax.random.normal(k3, (n,), dtype=jnp.float32) * 0.05
    out = jax.block_until_ready(basic_decoder(x, w, b, pool_output_size=p))
    ref = basic_decoder_ref(x, w, b, p)
    assert out.shape == (B, n), out.shape
    out_np = np.asarray(out, dtype=np.float64)
    assert np.allclose(out_np, ref, atol=3e-2, rtol=3e-2), float(np.max(np.abs(out_np - ref)))

    # --- config 2: MXU fc path, non-divisible pooling bins, C / n_classes padding ---
    B, C, H, W, p, n = 3, 192, 7, 7, 2, 200
    k1, k2, k3, key = jax.random.split(key, 4)
    x = jax.random.normal(k1, (B, C, H, W), dtype=jnp.float32)
    w = jax.random.normal(k2, (n, C * p * p), dtype=jnp.float32) * 0.05
    b = jax.random.normal(k3, (n,), dtype=jnp.float32) * 0.05
    out = jax.block_until_ready(basic_decoder(x, w, b, pool_output_size=p))
    ref = basic_decoder_ref(x, w, b, p)
    assert out.shape == (B, n), out.shape
    out_np = np.asarray(out, dtype=np.float64)
    assert np.allclose(out_np, ref, atol=3e-2, rtol=3e-2), float(np.max(np.abs(out_np - ref)))

    print("KERNEL_OK")
</pallas_src>

<mosaic_0001>
module attributes {stable_mosaic.version = 11 : i64} {
  func.func @kernel(%arg0: i32, %arg1: i32, %arg2: memref<2x256x512xbf16, #tpu.memory_space<vmem>>, %arg3: memref<4x256xbf16, #tpu.memory_space<vmem>>, %arg4: memref<1x4x512xbf16, #tpu.memory_space<vmem>>, %arg5: memref<1x1xf32, #tpu.memory_space<vmem>>, %arg6: memref<2x1xf32, #tpu.memory_space<vmem>>, %arg7: memref<2x1xf32, #tpu.memory_space<vmem>>) attributes {dimension_semantics = [#tpu.dimension_semantics<parallel>, #tpu.dimension_semantics<arbitrary>], iteration_bounds = array<i64: 1, 1>, scalar_prefetch = 0 : i64, scratch_operands = 1 : i64, tpu.core_type = #tpu.core_type<tc>, window_params = [{transform_indices = @transform_0, window_bounds = array<i64: 2, 256, 512>}, {pipeline_mode = #tpu.pipeline_mode<synchronous>, transform_indices = @transform_1, window_bounds = array<i64: 4, 256>}, {transform_indices = @transform_2, window_bounds = array<i64: 1, 4, 512>}, {pipeline_mode = #tpu.pipeline_mode<synchronous>, transform_indices = @transform_3, window_bounds = array<i64: 1, 1>}, {transform_indices = @transform_4, window_bounds = array<i64: 2, 1>}]} {
    %c0_i32 = arith.constant 0 : i32
    %0 = arith.cmpi eq, %arg1, %c0_i32 : i32
    %1 = arith.extui %0 : i1 to i32
    %c0_i32_0 = arith.constant 0 : i32
    %2 = arith.cmpi ne, %1, %c0_i32_0 : i32
    scf.if %2 {
      %cst_16 = arith.constant 0.000000e+00 : f32
      %24 = vector.broadcast %cst_16 : f32 to vector<2x1xf32>
      %c0_17 = arith.constant 0 : index
      %c0_18 = arith.constant 0 : index
      %25 = vector.load %arg7[%c0_17, %c0_18] : memref<2x1xf32, #tpu.memory_space<vmem>>, vector<2x1xf32>
      tpu.vector_store %arg7[%c0_17, %c0_18], %24 {strides = array<i32>} : memref<2x1xf32, #tpu.memory_space<vmem>>, vector<2x1xf32>,
    } else {
    }
    %c0 = arith.constant 0 : index
    %c0_1 = arith.constant 0 : index
    %c0_2 = arith.constant 0 : index
    %3 = vector.load %arg2[%c0, %c0_1, %c0_2] : memref<2x256x512xbf16, #tpu.memory_space<vmem>>, vector<2x256x512xbf16>
    %c0_3 = arith.constant 0 : index
    %c0_4 = arith.constant 0 : index
    %4 = vector.load %arg3[%c0_3, %c0_4] : memref<4x256xbf16, #tpu.memory_space<vmem>>, vector<4x256xbf16>
    %5 = vector.shape_cast %4 : vector<4x256xbf16> to vector<1x4x256xbf16>
    %6 = vector.shape_cast %5 : vector<1x4x256xbf16> to vector<1x4x256xbf16>
    %7 = vector.broadcast %6 : vector<1x4x256xbf16> to vector<2x4x256xbf16>
    "tpu.trace_start"() <{level = 10 : i32, message = "bkh,bhc->bkc"}> : () -> ()
    %cst = arith.constant dense<0.000000e+00> : vector<2x4x512xf32>
    %8 = tpu.matmul %7, %3, %cst {dimension_numbers = #tpu.dot_dimension_numbers<[2], [1], [1], [2], [0, 0, 0, 1, 1, 2], [0], [0]>} : vector<2x4x256xbf16>, vector<2x256x512xbf16>, vector<2x4x512xf32> -> vector<2x4x512xf32>
    "tpu.trace_stop"() : () -> ()
    %c0_5 = arith.constant 0 : index
    %c0_6 = arith.constant 0 : index
    %c0_7 = arith.constant 0 : index
    %9 = vector.load %arg4[%c0_5, %c0_6, %c0_7] : memref<1x4x512xbf16, #tpu.memory_space<vmem>>, vector<1x4x512xbf16>
    %10 = vector.shape_cast %9 : vector<1x4x512xbf16> to vector<4x512xbf16>
    %11 = arith.extf %10 : vector<4x512xbf16> to vector<4x512xf32>
    %12 = vector.shape_cast %11 : vector<4x512xf32> to vector<1x4x512xf32>
    %13 = vector.broadcast %12 : vector<1x4x512xf32> to vector<2x4x512xf32>
    %14 = arith.mulf %8, %13 : vector<2x4x512xf32>
    %cst_8 = arith.constant dense<0.000000e+00> : vector<2x4xf32>
    %15 = vector.multi_reduction <add>, %14, %cst_8 [2] : vector<2x4x512xf32> to vector<2x4xf32>
    %cst_9 = arith.constant dense<0.000000e+00> : vector<2xf32>
    %16 = vector.multi_reduction <add>, %15, %cst_9 [1] : vector<2x4xf32> to vector<2xf32>
    %17 = vector.shape_cast %16 : vector<2xf32> to vector<2x1xf32>
    %c0_10 = arith.constant 0 : index
    %c0_11 = arith.constant 0 : index
    %18 = vector.load %arg7[%c0_10, %c0_11] : memref<2x1xf32, #tpu.memory_space<vmem>>, vector<2x1xf32>
    %19 = arith.addf %18, %17 : vector<2x1xf32>
    %c0_12 = arith.constant 0 : index
    %c0_13 = arith.constant 0 : index
    %20 = vector.load %arg7[%c0_12, %c0_13] : memref<2x1xf32, #tpu.memory_space<vmem>>, vector<2x1xf32>
    tpu.vector_store %arg7[%c0_12, %c0_13], %19 {strides = array<i32>} : memref<2x1xf32, #tpu.memory_space<vmem>>, vector<2x1xf32>,
    %c0_i32_14 = arith.constant 0 : i32
    %21 = arith.cmpi eq, %arg1, %c0_i32_14 : i32
    %22 = arith.extui %21 : i1 to i32
    %c0_i32_15 = arith.constant 0 : i32
    %23 = arith.cmpi ne, %22, %c0_i32_15 : i32
    scf.if %23 {
      %c0_16 = arith.constant 0 : index
      %c0_17 = arith.constant 0 : index
      %24 = vector.load %arg7[%c0_16, %c0_17] : memref<2x1xf32, #tpu.memory_space<vmem>>, vector<2x1xf32>
      %c0_18 = arith.constant 0 : index
      %c0_19 = arith.constant 0 : index
      %25 = vector.load %arg5[%c0_18, %c0_19] : memref<1x1xf32, #tpu.memory_space<vmem>>, vector<1x1xf32>
      %26 = vector.broadcast %25 : vector<1x1xf32> to vector<2x1xf32>
      %27 = arith.addf %24, %26 : vector<2x1xf32>
      %c0_20 = arith.constant 0 : index
      %c0_21 = arith.constant 0 : index
      %28 = vector.load %arg6[%c0_20, %c0_21] : memref<2x1xf32, #tpu.memory_space<vmem>>, vector<2x1xf32>
      tpu.vector_store %arg6[%c0_20, %c0_21], %27 {strides = array<i32>} : memref<2x1xf32, #tpu.memory_space<vmem>>, vector<2x1xf32>,
    } else {
    }
    return
  }
  func.func @transform_0(%arg0: i32, %arg1: i32) -> (i32, i32, i32) {
    %c0_i32 = arith.constant 0 : i32
    %c0_i32_0 = arith.constant 0 : i32
    return %arg0, %c0_i32, %arg1 : i32, i32, i32
  }
  func.func @transform_1(%arg0: i32, %arg1: i32) -> (i32, i32) {
    %c0_i32 = arith.constant 0 : i32
    %c0_i32_0 = arith.constant 0 : i32
    %c0_i32_1 = arith.constant 0 : i32
    return %c0_i32, %c0_i32_0 : i32, i32
  }
  func.func @transform_2(%arg0: i32, %arg1: i32) -> (i32, i32, i32) {
    %c0_i32 = arith.constant 0 : i32
    %c0_i32_0 = arith.constant 0 : i32
    %c0_i32_1 = arith.constant 0 : i32
    return %c0_i32, %c0_i32_0, %arg1 : i32, i32, i32
  }
  func.func @transform_3(%arg0: i32, %arg1: i32) -> (i32, i32) {
    %c0_i32 = arith.constant 0 : i32
    %c0_i32_0 = arith.constant 0 : i32
    %c0_i32_1 = arith.constant 0 : i32
    return %c0_i32, %c0_i32_0 : i32, i32
  }
  func.func @transform_4(%arg0: i32, %arg1: i32) -> (i32, i32) {
    %c0_i32 = arith.constant 0 : i32
    %c0_i32_0 = arith.constant 0 : i32
    return %arg0, %c0_i32 : i32, i32
  }
}

</mosaic_0001>

<llo_original>
// kernel: tpu_custom_call.1
$region0: #{tpu_custom_call.1}
  #allocation0 [shape = 'u32[]', space=smem, size = 0x4, offset = 0x4, fixed_abs, tag = 'smem constant byte address 0x4 - core index']
  #allocation1 [shape = 'u32[144,128]{1,0:T(1,128)}', space=vmem, size = 0x12000, scoped, tag = 'internal scratch']
  #allocation2 [shape = 'f32[2,1]{1,0:T(2,128)}', space=vmem, size = 0x400, scoped, tag = 'scratch operand']
  #allocation3 [shape = 'f32[1,1]{1,0:T(1,128)S(1)}', space=vmem, size = 0x200, scoped, tag = 'scoped memory for tpu_custom_call.1']
  %s0 = inlined_call_operand.hbm [shape: bf16[2,256,512], index: 0, kind: input, shape index: {}]
  %s1 = inlined_call_operand.hbm [shape: bf16[4,256], index: 1, kind: input, shape index: {}]
  %s2 = inlined_call_operand.hbm [shape: bf16[1,4,512], index: 2, kind: input, shape index: {}]
  %s3 = inlined_call_operand.<no memory space> [shape: f32[1,1], index: 3, kind: input, shape index: {}]
  %s4 = inlined_call_operand.vmem [shape: f32[2,1], index: 4, kind: output, shape index: {}]
  %s5 = sld [smem:[#allocation0]]
  $region46: #{tpu_custom_call.1} parent=0
    _
  %s7 = ssub.s32 1, %s5
  %s8 = scalar_select 0, %s7, %s5
  %v9 = vstv %s3
  %10 = vst [vmem:[#allocation3] sm:$0x1] %v9
  $region1: #{tpu_custom_call.1} parent=0
    #allocation4 [shape = 'u8[524288]{0}', space=vmem, size = 0x80000, scoped, tag = 'input window, operand 0, single buffered']
    #allocation5 [shape = 's32[1]{0}', space=sflag, size = 0x4, scoped, tag = 'scoped memory for tpu_custom_call.1']
    #allocation6 [shape = 'u8[2048]{0}', space=vmem, size = 0x800, scoped, tag = 'input window, operand 1, single buffered']
    #allocation7 [shape = 's32[1]{0}', space=sflag, size = 0x4, scoped, tag = 'scoped memory for tpu_custom_call.1']
    #allocation8 [shape = 'u8[4096]{0}', space=vmem, size = 0x1000, scoped, tag = 'input window, operand 2, single buffered']
    %11 = vsyncpa [#allocation5], 0
    %12 = vsyncpa [#allocation7], 0
    // Predicated region
    $region2: #{tpu_custom_call.1} parent=1 // pred_check
      _
    $region3: #{tpu_custom_call.1} parent=1 // pred_check_branch
      %14 = sbr.rel (0) target = $region5
    $region4: #{tpu_custom_call.1} parent=1 // pred_region
      %s16 = ssub.s32 16384, 16384
      %17 = vsyncadd [#allocation5], %s16
      %s18 = sshll.u32 [#allocation4], 4
      %s19 = int_to_ptr.vmem [resolvable:$true] %s18
      %24 = dma.hbm_to_vmem [thread:$0]  %s0, 16384, %s19, [#allocation5], 256, 256, 16
    $region5: #{tpu_custom_call.1} parent=1 // pred_fallthru
      _
    // Predicated region
    $region6: #{tpu_custom_call.1} parent=1 // pred_check
      _
    $region7: #{tpu_custom_call.1} parent=1 // pred_check_branch
      %26 = sbr.rel (0) target = $region9
    $region8: #{tpu_custom_call.1} parent=1 // pred_region
      %s28 = ssub.s32 64, 64
      %29 = vsyncadd [#allocation7], %s28
      %s31 = sshll.u32 [#allocation6], 4
      %s32 = int_to_ptr.vmem [resolvable:$true] %s31
      %34 = dma.hbm_to_vmem [thread:$0]  %s1, 64, %s32, [#allocation7]
    $region9: #{tpu_custom_call.1} parent=1 // pred_fallthru
      _
    // Predicated region
    $region10: #{tpu_custom_call.1} parent=1 // pred_check
      _
    $region11: #{tpu_custom_call.1} parent=1 // pred_check_branch
      %36 = sbr.rel (0) target = $region13
    $region12: #{tpu_custom_call.1} parent=1 // pred_region
      %s38 = ssub.s32 128, 128
      %39 = vsyncadd [#allocation7], %s38
      %s41 = sshll.u32 [#allocation8], 4
      %s42 = int_to_ptr.vmem [resolvable:$true] %s41
      %44 = dma.hbm_to_vmem [thread:$0]  %s2, 128, %s42, [#allocation7]
    $region13: #{tpu_custom_call.1} parent=1 // pred_fallthru
      _
    // Predicated region
    $region14: #{tpu_custom_call.1} parent=1 // pred_check
      _
    $region15: #{tpu_custom_call.1} parent=1 // pred_check_branch
      %46 = sbr.rel (0) target = $region17
    $region16: #{tpu_custom_call.1} parent=1 // pred_region
      _
    $region17: #{tpu_custom_call.1} parent=1 // pred_fallthru
      _
    // Predicated region
    $region18: #{tpu_custom_call.1} parent=1 // pred_check
      _
    $region19: #{tpu_custom_call.1} parent=1 // pred_check_branch
      %48 = sbr.rel (0) target = $region21
    $region20: #{tpu_custom_call.1} parent=1 // pred_region
      %49 = dma.done [#allocation5], 16384
    $region21: #{tpu_custom_call.1} parent=1 // pred_fallthru
      _
    // Predicated region
    $region22: #{tpu_custom_call.1} parent=1 // pred_check
      _
    $region23: #{tpu_custom_call.1} parent=1 // pred_check_branch
      %51 = sbr.rel (0) target = $region25
    $region24: #{tpu_custom_call.1} parent=1 // pred_region
      %52 = dma.done [#allocation7], 64
    $region25: #{tpu_custom_call.1} parent=1 // pred_fallthru
      _
    // Predicated region
    $region26: #{tpu_custom_call.1} parent=1 // pred_check
      _
    $region27: #{tpu_custom_call.1} parent=1 // pred_check_branch
      %54 = sbr.rel (0) target = $region29
    $region28: #{tpu_custom_call.1} parent=1 // pred_region
      %55 = dma.done [#allocation7], 128
    $region29: #{tpu_custom_call.1} parent=1 // pred_fallthru
      _
    %p56 = scmp.eq.s32.totalorder 0, 0
    // Predicated region
    $region30: #{tpu_custom_call.1} parent=1 // pred_check
      %p57 = pneg %p56
    $region31: #{tpu_custom_call.1} parent=1 // pred_check_branch
      %59 = sbr.rel (%p57) target = $region33
    $region32: #{tpu_custom_call.1} parent=1 // pred_region
      %vm60 = vcmask 1024
      %61 = vst.msk [vmem:[#allocation2] sm:$0x3] %vm60, 0.0
    $region33: #{tpu_custom_call.1} parent=1 // pred_fallthru
      _
    %v62 = vld [vmem:[#allocation4] sm:$0xff]
    %v63 = vld [vmem:[#allocation4 + $0x8] sm:$0xff]
    %v64 = vld [vmem:[#allocation4 + $0x10] sm:$0xff]
    %v65 = vld [vmem:[#allocation4 + $0x18] sm:$0xff]
    %v66 = vld [vmem:[#allocation4 + $0x20] sm:$0xff]
    %v67 = vld [vmem:[#allocation4 + $0x28] sm:$0xff]
    %v68 = vld [vmem:[#allocation4 + $0x30] sm:$0xff]
    %v69 = vld [vmem:[#allocation4 + $0x38] sm:$0xff]
    %v70 = vld [vmem:[#allocation4 + $0x40] sm:$0xff]
    %v71 = vld [vmem:[#allocation4 + $0x48] sm:$0xff]
    %v72 = vld [vmem:[#allocation4 + $0x50] sm:$0xff]
    %v73 = vld [vmem:[#allocation4 + $0x58] sm:$0xff]
    %v74 = vld [vmem:[#allocation4 + $0x60] sm:$0xff]
    %v75 = vld [vmem:[#allocation4 + $0x68] sm:$0xff]
    %v76 = vld [vmem:[#allocation4 + $0x70] sm:$0xff]
    %v77 = vld [vmem:[#allocation4 + $0x78] sm:$0xff]
    %v78 = vld [vmem:[#allocation4 + $0x80] sm:$0xff]
    %v79 = vld [vmem:[#allocation4 + $0x88] sm:$0xff]
    %v80 = vld [vmem:[#allocation4 + $0x90] sm:$0xff]
    %v81 = vld [vmem:[#allocation4 + $0x98] sm:$0xff]
    %v82 = vld [vmem:[#allocation4 + $0xa0] sm:$0xff]
    %v83 = vld [vmem:[#allocation4 + $0xa8] sm:$0xff]
    %v84 = vld [vmem:[#allocation4 + $0xb0] sm:$0xff]
    %v85 = vld [vmem:[#allocation4 + $0xb8] sm:$0xff]
    %v86 = vld [vmem:[#allocation4 + $0xc0] sm:$0xff]
    %v87 = vld [vmem:[#allocation4 + $0xc8] sm:$0xff]
    %v88 = vld [vmem:[#allocation4 + $0xd0] sm:$0xff]
    %v89 = vld [vmem:[#allocation4 + $0xd8] sm:$0xff]
    %v90 = vld [vmem:[#allocation4 + $0xe0] sm:$0xff]
    %v91 = vld [vmem:[#allocation4 + $0xe8] sm:$0xff]
    %v92 = vld [vmem:[#allocation4 + $0xf0] sm:$0xff]
    %v93 = vld [vmem:[#allocation4 + $0xf8] sm:$0xff]
    %v94 = vld [vmem:[#allocation4 + $0x100] sm:$0xff]
    %v95 = vld [vmem:[#allocation4 + $0x108] sm:$0xff]
    %v96 = vld [vmem:[#allocation4 + $0x110] sm:$0xff]
    %v97 = vld [vmem:[#allocation4 + $0x118] sm:$0xff]
    %v98 = vld [vmem:[#allocation4 + $0x120] sm:$0xff]
    %v99 = vld [vmem:[#allocation4 + $0x128] sm:$0xff]
    %v100 = vld [vmem:[#allocation4 + $0x130] sm:$0xff]
    %v101 = vld [vmem:[#allocation4 + $0x138] sm:$0xff]
    %v102 = vld [vmem:[#allocation4 + $0x140] sm:$0xff]
    %v103 = vld [vmem:[#allocation4 + $0x148] sm:$0xff]
    %v104 = vld [vmem:[#allocation4 + $0x150] sm:$0xff]
    %v105 = vld [vmem:[#allocation4 + $0x158] sm:$0xff]
    %v106 = vld [vmem:[#allocation4 + $0x160] sm:$0xff]
    %v107 = vld [vmem:[#allocation4 + $0x168] sm:$0xff]
    %v108 = vld [vmem:[#allocation4 + $0x170] sm:$0xff]
    %v109 = vld [vmem:[#allocation4 + $0x178] sm:$0xff]
    %v110 = vld [vmem:[#allocation4 + $0x180] sm:$0xff]
    %v111 = vld [vmem:[#allocation4 + $0x188] sm:$0xff]
    %v112 = vld [vmem:[#allocation4 + $0x190] sm:$0xff]
    %v113 = vld [vmem:[#allocation4 + $0x198] sm:$0xff]
    %v114 = vld [vmem:[#allocation4 + $0x1a0] sm:$0xff]
    %v115 = vld [vmem:[#allocation4 + $0x1a8] sm:$0xff]
    %v116 = vld [vmem:[#allocation4 + $0x1b0] sm:$0xff]
    %v117 = vld [vmem:[#allocation4 + $0x1b8] sm:$0xff]
    %v118 = vld [vmem:[#allocation4 + $0x1c0] sm:$0xff]
    %v119 = vld [vmem:[#allocation4 + $0x1c8] sm:$0xff]
    %v120 = vld [vmem:[#allocation4 + $0x1d0] sm:$0xff]
    %v121 = vld [vmem:[#allocation4 + $0x1d8] sm:$0xff]
    %v122 = vld [vmem:[#allocation4 + $0x1e0] sm:$0xff]
    %v123 = vld [vmem:[#allocation4 + $0x1e8] sm:$0xff]
    %v124 = vld [vmem:[#allocation4 + $0x1f0] sm:$0xff]
    %v125 = vld [vmem:[#allocation4 + $0x1f8] sm:$0xff]
    %v126 = vld [vmem:[#allocation4 + $0x200] sm:$0xff]
    %v127 = vld [vmem:[#allocation4 + $0x208] sm:$0xff]
    %v128 = vld [vmem:[#allocation4 + $0x210] sm:$0xff]
    %v129 = vld [vmem:[#allocation4 + $0x218] sm:$0xff]
    %v130 = vld [vmem:[#allocation4 + $0x220] sm:$0xff]
    %v131 = vld [vmem:[#allocation4 + $0x228] sm:$0xff]
    %v132 = vld [vmem:[#allocation4 + $0x230] sm:$0xff]
    %v133 = vld [vmem:[#allocation4 + $0x238] sm:$0xff]
    %v134 = vld [vmem:[#allocation4 + $0x240] sm:$0xff]
    %v135 = vld [vmem:[#allocation4 + $0x248] sm:$0xff]
    %v136 = vld [vmem:[#allocation4 + $0x250] sm:$0xff]
    %v137 = vld [vmem:[#allocation4 + $0x258] sm:$0xff]
    %v138 = vld [vmem:[#allocation4 + $0x260] sm:$0xff]
    %v139 = vld [vmem:[#allocation4 + $0x268] sm:$0xff]
    %v140 = vld [vmem:[#allocation4 + $0x270] sm:$0xff]
    %v141 = vld [vmem:[#allocation4 + $0x278] sm:$0xff]
    %v142 = vld [vmem:[#allocation4 + $0x280] sm:$0xff]
    %v143 = vld [vmem:[#allocation4 + $0x288] sm:$0xff]
    %v144 = vld [vmem:[#allocation4 + $0x290] sm:$0xff]
    %v145 = vld [vmem:[#allocation4 + $0x298] sm:$0xff]
    %v146 = vld [vmem:[#allocation4 + $0x2a0] sm:$0xff]
    %v147 = vld [vmem:[#allocation4 + $0x2a8] sm:$0xff]
    %v148 = vld [vmem:[#allocation4 + $0x2b0] sm:$0xff]
    %v149 = vld [vmem:[#allocation4 + $0x2b8] sm:$0xff]
    %v150 = vld [vmem:[#allocation4 + $0x2c0] sm:$0xff]
    %v151 = vld [vmem:[#allocation4 + $0x2c8] sm:$0xff]
    %v152 = vld [vmem:[#allocation4 + $0x2d0] sm:$0xff]
    %v153 = vld [vmem:[#allocation4 + $0x2d8] sm:$0xff]
    %v154 = vld [vmem:[#allocation4 + $0x2e0] sm:$0xff]
    %v155 = vld [vmem:[#allocation4 + $0x2e8] sm:$0xff]
    %v156 = vld [vmem:[#allocation4 + $0x2f0] sm:$0xff]
    %v157 = vld [vmem:[#allocation4 + $0x2f8] sm:$0xff]
    %v158 = vld [vmem:[#allocation4 + $0x300] sm:$0xff]
    %v159 = vld [vmem:[#allocation4 + $0x308] sm:$0xff]
    %v160 = vld [vmem:[#allocation4 + $0x310] sm:$0xff]
    %v161 = vld [vmem:[#allocation4 + $0x318] sm:$0xff]
    %v162 = vld [vmem:[#allocation4 + $0x320] sm:$0xff]
    %v163 = vld [vmem:[#allocation4 + $0x328] sm:$0xff]
    %v164 = vld [vmem:[#allocation4 + $0x330] sm:$0xff]
    %v165 = vld [vmem:[#allocation4 + $0x338] sm:$0xff]
    %v166 = vld [vmem:[#allocation4 + $0x340] sm:$0xff]
    %v167 = vld [vmem:[#allocation4 + $0x348] sm:$0xff]
    %v168 = vld [vmem:[#allocation4 + $0x350] sm:$0xff]
    %v169 = vld [vmem:[#allocation4 + $0x358] sm:$0xff]
    %v170 = vld [vmem:[#allocation4 + $0x360] sm:$0xff]
    %v171 = vld [vmem:[#allocation4 + $0x368] sm:$0xff]
    %v172 = vld [vmem:[#allocation4 + $0x370] sm:$0xff]
    %v173 = vld [vmem:[#allocation4 + $0x378] sm:$0xff]
    %v174 = vld [vmem:[#allocation4 + $0x380] sm:$0xff]
    %v175 = vld [vmem:[#allocation4 + $0x388] sm:$0xff]
    %v176 = vld [vmem:[#allocation4 + $0x390] sm:$0xff]
    %v177 = vld [vmem:[#allocation4 + $0x398] sm:$0xff]
    %v178 = vld [vmem:[#allocation4 + $0x3a0] sm:$0xff]
    %v179 = vld [vmem:[#allocation4 + $0x3a8] sm:$0xff]
    %v180 = vld [vmem:[#allocation4 + $0x3b0] sm:$0xff]
    %v181 = vld [vmem:[#allocation4 + $0x3b8] sm:$0xff]
    %v182 = vld [vmem:[#allocation4 + $0x3c0] sm:$0xff]
    %v183 = vld [vmem:[#allocation4 + $0x3c8] sm:$0xff]
    %v184 = vld [vmem:[#allocation4 + $0x3d0] sm:$0xff]
    %v185 = vld [vmem:[#allocation4 + $0x3d8] sm:$0xff]
    %v186 = vld [vmem:[#allocation4 + $0x3e0] sm:$0xff]
    %v187 = vld [vmem:[#allocation4 + $0x3e8] sm:$0xff]
    %v188 = vld [vmem:[#allocation4 + $0x3f0] sm:$0xff]
    %v189 = vld [vmem:[#allocation4 + $0x3f8] sm:$0xff]
    %v190 = vld [vmem:[#allocation6] sm:$0xf]
    %v193 = vunpack.c.l.s4 1983009808
    %v194 = vunpack.c.0.s8 %v193
    %v195 = vlaneseq
    %v196 = vshrl.u32 %v195, 7
    %v197 = vsub.s32 %v194, %v196
    %v198 = vrot.slane %v190, %v197
    %v199 = vcombine.high %v198, %v198
    %v266 = vunpack.c.l.b16 %v62
    %v267 = vunpack.c.h.b16 %v62
    %v268 = vunpack.c.l.b16 %v63
    %v269 = vunpack.c.h.b16 %v63
    %v270 = vunpack.c.l.b16 %v64
    %v271 = vunpack.c.h.b16 %v64
    %v272 = vunpack.c.l.b16 %v65
    %v273 = vunpack.c.h.b16 %v65
    %v274 = vunpack.c.l.b16 %v66
    %v275 = vunpack.c.h.b16 %v66
    %v276 = vunpack.c.l.b16 %v67
    %v277 = vunpack.c.h.b16 %v67
    %v278 = vunpack.c.l.b16 %v68
    %v279 = vunpack.c.h.b16 %v68
    %v280 = vunpack.c.l.b16 %v69
    %v281 = vunpack.c.h.b16 %v69
    %v282 = vunpack.c.l.b16 %v70
    %v283 = vunpack.c.h.b16 %v70
    %v284 = vunpack.c.l.b16 %v71
    %v285 = vunpack.c.h.b16 %v71
    %v286 = vunpack.c.l.b16 %v72
    %v287 = vunpack.c.h.b16 %v72
    %v288 = vunpack.c.l.b16 %v73
    %v289 = vunpack.c.h.b16 %v73
    %v290 = vunpack.c.l.b16 %v74
    %v291 = vunpack.c.h.b16 %v74
    %v292 = vunpack.c.l.b16 %v75
    %v293 = vunpack.c.h.b16 %v75
    %v294 = vunpack.c.l.b16 %v76
    %v295 = vunpack.c.h.b16 %v76
    %v296 = vunpack.c.l.b16 %v77
    %v297 = vunpack.c.h.b16 %v77
    %v298 = vunpack.c.l.b16 %v78
    %v299 = vunpack.c.h.b16 %v78
    %v300 = vunpack.c.l.b16 %v79
    %v301 = vunpack.c.h.b16 %v79
    %v302 = vunpack.c.l.b16 %v80
    %v303 = vunpack.c.h.b16 %v80
    %v304 = vunpack.c.l.b16 %v81
    %v305 = vunpack.c.h.b16 %v81
    %v306 = vunpack.c.l.b16 %v82
    %v307 = vunpack.c.h.b16 %v82
    %v308 = vunpack.c.l.b16 %v83
    %v309 = vunpack.c.h.b16 %v83
    %v310 = vunpack.c.l.b16 %v84
    %v311 = vunpack.c.h.b16 %v84
    %v312 = vunpack.c.l.b16 %v85
    %v313 = vunpack.c.h.b16 %v85
    %v314 = vunpack.c.l.b16 %v86
    %v315 = vunpack.c.h.b16 %v86
    %v316 = vunpack.c.l.b16 %v87
    %v317 = vunpack.c.h.b16 %v87
    %v318 = vunpack.c.l.b16 %v88
    %v319 = vunpack.c.h.b16 %v88
    %v320 = vunpack.c.l.b16 %v89
    %v321 = vunpack.c.h.b16 %v89
    %v322 = vunpack.c.l.b16 %v90
    %v323 = vunpack.c.h.b16 %v90
    %v324 = vunpack.c.l.b16 %v91
    %v325 = vunpack.c.h.b16 %v91
    %v326 = vunpack.c.l.b16 %v92
    %v327 = vunpack.c.h.b16 %v92
    %v328 = vunpack.c.l.b16 %v93
    %v329 = vunpack.c.h.b16 %v93
    %v330 = vunpack.c.l.b16 %v94
    %v331 = vunpack.c.h.b16 %v94
    %v332 = vunpack.c.l.b16 %v95
    %v333 = vunpack.c.h.b16 %v95
    %v334 = vunpack.c.l.b16 %v96
    %v335 = vunpack.c.h.b16 %v96
    %v336 = vunpack.c.l.b16 %v97
    %v337 = vunpack.c.h.b16 %v97
    %v338 = vunpack.c.l.b16 %v98
    %v339 = vunpack.c.h.b16 %v98
    %v340 = vunpack.c.l.b16 %v99
    %v341 = vunpack.c.h.b16 %v99
    %v342 = vunpack.c.l.b16 %v100
    %v343 = vunpack.c.h.b16 %v100
    %v344 = vunpack.c.l.b16 %v101
    %v345 = vunpack.c.h.b16 %v101
    %v346 = vunpack.c.l.b16 %v102
    %v347 = vunpack.c.h.b16 %v102
    %v348 = vunpack.c.l.b16 %v103
    %v349 = vunpack.c.h.b16 %v103
    %v350 = vunpack.c.l.b16 %v104
    %v351 = vunpack.c.h.b16 %v104
    %v352 = vunpack.c.l.b16 %v105
    %v353 = vunpack.c.h.b16 %v105
    %v354 = vunpack.c.l.b16 %v106
    %v355 = vunpack.c.h.b16 %v106
    %v356 = vunpack.c.l.b16 %v107
    %v357 = vunpack.c.h.b16 %v107
    %v358 = vunpack.c.l.b16 %v108
    %v359 = vunpack.c.h.b16 %v108
    %v360 = vunpack.c.l.b16 %v109
    %v361 = vunpack.c.h.b16 %v109
    %v362 = vunpack.c.l.b16 %v110
    %v363 = vunpack.c.h.b16 %v110
    %v364 = vunpack.c.l.b16 %v111
    %v365 = vunpack.c.h.b16 %v111
    %v366 = vunpack.c.l.b16 %v112
    %v367 = vunpack.c.h.b16 %v112
    %v368 = vunpack.c.l.b16 %v113
    %v369 = vunpack.c.h.b16 %v113
    %v370 = vunpack.c.l.b16 %v114
    %v371 = vunpack.c.h.b16 %v114
    %v372 = vunpack.c.l.b16 %v115
    %v373 = vunpack.c.h.b16 %v115
    %v374 = vunpack.c.l.b16 %v116
    %v375 = vunpack.c.h.b16 %v116
    %v376 = vunpack.c.l.b16 %v117
    %v377 = vunpack.c.h.b16 %v117
    %v378 = vunpack.c.l.b16 %v118
    %v379 = vunpack.c.h.b16 %v118
    %v380 = vunpack.c.l.b16 %v119
    %v381 = vunpack.c.h.b16 %v119
    %v382 = vunpack.c.l.b16 %v120
    %v383 = vunpack.c.h.b16 %v120
    %v384 = vunpack.c.l.b16 %v121
    %v385 = vunpack.c.h.b16 %v121
    %v386 = vunpack.c.l.b16 %v122
    %v387 = vunpack.c.h.b16 %v122
    %v388 = vunpack.c.l.b16 %v123
    %v389 = vunpack.c.h.b16 %v123
    %v390 = vunpack.c.l.b16 %v124
    %v391 = vunpack.c.h.b16 %v124
    %v392 = vunpack.c.l.b16 %v125
    %v393 = vunpack.c.h.b16 %v125
    %v394 = vpack.c.b16 %v270, %v266
    %v395 = vpack.c.b16 %v271, %v267
    %v396 = vpack.c.b16 %v272, %v268
    %v397 = vpack.c.b16 %v273, %v269
    %v398 = vpack.c.b16 %v278, %v274
    %v399 = vpack.c.b16 %v279, %v275
    %v400 = vpack.c.b16 %v280, %v276
    %v401 = vpack.c.b16 %v281, %v277
    %v402 = vpack.c.b16 %v286, %v282
    %v403 = vpack.c.b16 %v287, %v283
    %v404 = vpack.c.b16 %v288, %v284
    %v405 = vpack.c.b16 %v289, %v285
    %v406 = vpack.c.b16 %v294, %v290
    %v407 = vpack.c.b16 %v295, %v291
    %v408 = vpack.c.b16 %v296, %v292
    %v409 = vpack.c.b16 %v297, %v293
    %v410 = vpack.c.b16 %v302, %v298
    %v411 = vpack.c.b16 %v303, %v299
    %v412 = vpack.c.b16 %v304, %v300
    %v413 = vpack.c.b16 %v305, %v301
    %v414 = vpack.c.b16 %v310, %v306
    %v415 = vpack.c.b16 %v311, %v307
    %v416 = vpack.c.b16 %v312, %v308
    %v417 = vpack.c.b16 %v313, %v309
    %v418 = vpack.c.b16 %v318, %v314
    %v419 = vpack.c.b16 %v319, %v315
    %v420 = vpack.c.b16 %v320, %v316
    %v421 = vpack.c.b16 %v321, %v317
    %v422 = vpack.c.b16 %v326, %v322
    %v423 = vpack.c.b16 %v327, %v323
    %v424 = vpack.c.b16 %v328, %v324
    %v425 = vpack.c.b16 %v329, %v325
    %v426 = vpack.c.b16 %v334, %v330
    %v427 = vpack.c.b16 %v335, %v331
    %v428 = vpack.c.b16 %v336, %v332
    %v429 = vpack.c.b16 %v337, %v333
    %v430 = vpack.c.b16 %v342, %v338
    %v431 = vpack.c.b16 %v343, %v339
    %v432 = vpack.c.b16 %v344, %v340
    %v433 = vpack.c.b16 %v345, %v341
    %v434 = vpack.c.b16 %v350, %v346
    %v435 = vpack.c.b16 %v351, %v347
    %v436 = vpack.c.b16 %v352, %v348
    %v437 = vpack.c.b16 %v353, %v349
    %v438 = vpack.c.b16 %v358, %v354
    %v439 = vpack.c.b16 %v359, %v355
    %v440 = vpack.c.b16 %v360, %v356
    %v441 = vpack.c.b16 %v361, %v357
    %v442 = vpack.c.b16 %v366, %v362
    %v443 = vpack.c.b16 %v367, %v363
    %v444 = vpack.c.b16 %v368, %v364
    %v445 = vpack.c.b16 %v369, %v365
    %v446 = vpack.c.b16 %v374, %v370
    %v447 = vpack.c.b16 %v375, %v371
    %v448 = vpack.c.b16 %v376, %v372
    %v449 = vpack.c.b16 %v377, %v373
    %v450 = vpack.c.b16 %v382, %v378
    %v451 = vpack.c.b16 %v383, %v379
    %v452 = vpack.c.b16 %v384, %v380
    %v453 = vpack.c.b16 %v385, %v381
    %v454 = vpack.c.b16 %v390, %v386
    %v455 = vpack.c.b16 %v391, %v387
    %v456 = vpack.c.b16 %v392, %v388
    %v457 = vpack.c.b16 %v393, %v389
    %522 = vmatprep.subr.bf16.mxu0 %v423
    %523 = vmatpush1.bf16.msra.mxu0 %v422
    %524 = vmatprep.subr.bf16.mxu0 %v419
    %525 = vmatpush1.bf16.msra.mxu0 %v418
    %526 = vmatprep.subr.bf16.mxu0 %v415
    %527 = vmatpush1.bf16.msra.mxu0 %v414
    %528 = vmatprep.subr.bf16.mxu0 %v411
    %529 = vmatpush1.bf16.msra.mxu0 %v410
    %530 = vmatprep.subr.bf16.mxu0 %v407
    %531 = vmatpush1.bf16.msra.mxu0 %v406
    %532 = vmatprep.subr.bf16.mxu0 %v403
    %533 = vmatpush1.bf16.msra.mxu0 %v402
    %534 = vmatprep.subr.bf16.mxu0 %v399
    %535 = vmatpush1.bf16.msra.mxu0 %v398
    %536 = vmatprep.subr.bf16.mxu0 %v395
    %537 = vmatpush1.bf16.msra.mxu0 %v394
    %538 = vmatprep.subr.bf16.mxu0 %v455
    %539 = vmatpush2.bf16.msra.mxu0 %v454
    %540 = vmatprep.subr.bf16.mxu0 %v451
    %541 = vmatpush2.bf16.msra.mxu0 %v450
    %542 = vmatprep.subr.bf16.mxu0 %v447
    %543 = vmatpush2.bf16.msra.mxu0 %v446
    %544 = vmatprep.subr.bf16.mxu0 %v443
    %545 = vmatpush2.bf16.msra.mxu0 %v442
    %546 = vmatprep.subr.bf16.mxu0 %v439
    %547 = vmatpush2.bf16.msra.mxu0 %v438
    %548 = vmatprep.subr.bf16.mxu0 %v435
    %549 = vmatpush2.bf16.msra.mxu0 %v434
    %550 = vmatprep.subr.bf16.mxu0 %v431
    %551 = vmatpush2.bf16.msra.mxu0 %v430
    %552 = vmatprep.subr.bf16.mxu0 %v427
    %553 = vmatpush2.bf16.msra.mxu0 %v426
    %554 = vmatprep.mubr.bf16.mxu0 %v199
    %555 = vmatmul.mubr.bf16.gmra.mxu0 %v198
    %v556 = vpop.f32.mrf.mxu0
    %v557 = vadd.f32 0.0, %v556
    %v558 = vpop.f32.mrf.mxu0
    %v559 = vadd.f32 0.0, %v558
    %v560 = vpop.f32.mrf.mxu0
    %v561 = vpop.f32.mrf.mxu0
    %562 = vdwg.mxu0
    %563 = vmatprep.subr.bf16.mxu0 %v425
    %564 = vmatpush1.bf16.msra.mxu0 %v424
    %565 = vmatprep.subr.bf16.mxu0 %v421
    %566 = vmatpush1.bf16.msra.mxu0 %v420
    %567 = vmatprep.subr.bf16.mxu0 %v417
    %568 = vmatpush1.bf16.msra.mxu0 %v416
    %569 = vmatprep.subr.bf16.mxu0 %v413
    %570 = vmatpush1.bf16.msra.mxu0 %v412
    %571 = vmatprep.subr.bf16.mxu0 %v409
    %572 = vmatpush1.bf16.msra.mxu0 %v408
    %573 = vmatprep.subr.bf16.mxu0 %v405
    %574 = vmatpush1.bf16.msra.mxu0 %v404
    %575 = vmatprep.subr.bf16.mxu0 %v401
    %576 = vmatpush1.bf16.msra.mxu0 %v400
    %577 = vmatprep.subr.bf16.mxu0 %v397
    %578 = vmatpush1.bf16.msra.mxu0 %v396
    %579 = vmatprep.subr.bf16.mxu0 %v457
    %580 = vmatpush2.bf16.msra.mxu0 %v456
    %581 = vmatprep.subr.bf16.mxu0 %v453
    %582 = vmatpush2.bf16.msra.mxu0 %v452
    %583 = vmatprep.subr.bf16.mxu0 %v449
    %584 = vmatpush2.bf16.msra.mxu0 %v448
    %585 = vmatprep.subr.bf16.mxu0 %v445
    %586 = vmatpush2.bf16.msra.mxu0 %v444
    %587 = vmatprep.subr.bf16.mxu0 %v441
    %588 = vmatpush2.bf16.msra.mxu0 %v440
    %589 = vmatprep.subr.bf16.mxu0 %v437
    %590 = vmatpush2.bf16.msra.mxu0 %v436
    %591 = vmatprep.subr.bf16.mxu0 %v433
    %592 = vmatpush2.bf16.msra.mxu0 %v432
    %593 = vmatprep.subr.bf16.mxu0 %v429
    %594 = vmatpush2.bf16.msra.mxu0 %v428
    %595 = vmatprep.mubr.bf16.mxu0 %v199
    %596 = vmatmul.mubr.bf16.gmra.mxu0 %v198
    %v597 = vpop.f32.mrf.mxu0
    %v598 = vadd.f32 0.0, %v597
    %v599 = vpop.f32.mrf.mxu0
    %v600 = vadd.f32 0.0, %v599
    %v601 = vpop.f32.mrf.mxu0
    %v602 = vpop.f32.mrf.mxu0
    %603 = vdwg.mxu0
    %v668 = vunpack.c.l.b16 %v126
    %v669 = vunpack.c.h.b16 %v126
    %v670 = vunpack.c.l.b16 %v127
    %v671 = vunpack.c.h.b16 %v127
    %v672 = vunpack.c.l.b16 %v128
    %v673 = vunpack.c.h.b16 %v128
    %v674 = vunpack.c.l.b16 %v129
    %v675 = vunpack.c.h.b16 %v129
    %v676 = vunpack.c.l.b16 %v130
    %v677 = vunpack.c.h.b16 %v130
    %v678 = vunpack.c.l.b16 %v131
    %v679 = vunpack.c.h.b16 %v131
    %v680 = vunpack.c.l.b16 %v132
    %v681 = vunpack.c.h.b16 %v132
    %v682 = vunpack.c.l.b16 %v133
    %v683 = vunpack.c.h.b16 %v133
    %v684 = vunpack.c.l.b16 %v134
    %v685 = vunpack.c.h.b16 %v134
    %v686 = vunpack.c.l.b16 %v135
    %v687 = vunpack.c.h.b16 %v135
    %v688 = vunpack.c.l.b16 %v136
    %v689 = vunpack.c.h.b16 %v136
    %v690 = vunpack.c.l.b16 %v137
    %v691 = vunpack.c.h.b16 %v137
    %v692 = vunpack.c.l.b16 %v138
    %v693 = vunpack.c.h.b16 %v138
    %v694 = vunpack.c.l.b16 %v139
    %v695 = vunpack.c.h.b16 %v139
    %v696 = vunpack.c.l.b16 %v140
    %v697 = vunpack.c.h.b16 %v140
    %v698 = vunpack.c.l.b16 %v141
    %v699 = vunpack.c.h.b16 %v141
    %v700 = vunpack.c.l.b16 %v142
    %v701 = vunpack.c.h.b16 %v142
    %v702 = vunpack.c.l.b16 %v143
    %v703 = vunpack.c.h.b16 %v143
    %v704 = vunpack.c.l.b16 %v144
    %v705 = vunpack.c.h.b16 %v144
    %v706 = vunpack.c.l.b16 %v145
    %v707 = vunpack.c.h.b16 %v145
    %v708 = vunpack.c.l.b16 %v146
    %v709 = vunpack.c.h.b16 %v146
    %v710 = vunpack.c.l.b16 %v147
    %v711 = vunpack.c.h.b16 %v147
    %v712 = vunpack.c.l.b16 %v148
    %v713 = vunpack.c.h.b16 %v148
    %v714 = vunpack.c.l.b16 %v149
    %v715 = vunpack.c.h.b16 %v149
    %v716 = vunpack.c.l.b16 %v150
    %v717 = vunpack.c.h.b16 %v150
    %v718 = vunpack.c.l.b16 %v151
    %v719 = vunpack.c.h.b16 %v151
    %v720 = vunpack.c.l.b16 %v152
    %v721 = vunpack.c.h.b16 %v152
    %v722 = vunpack.c.l.b16 %v153
    %v723 = vunpack.c.h.b16 %v153
    %v724 = vunpack.c.l.b16 %v154
    %v725 = vunpack.c.h.b16 %v154
    %v726 = vunpack.c.l.b16 %v155
    %v727 = vunpack.c.h.b16 %v155
    %v728 = vunpack.c.l.b16 %v156
    %v729 = vunpack.c.h.b16 %v156
    %v730 = vunpack.c.l.b16 %v157
    %v731 = vunpack.c.h.b16 %v157
    %v732 = vunpack.c.l.b16 %v158
    %v733 = vunpack.c.h.b16 %v158
    %v734 = vunpack.c.l.b16 %v159
    %v735 = vunpack.c.h.b16 %v159
    %v736 = vunpack.c.l.b16 %v160
    %v737 = vunpack.c.h.b16 %v160
    %v738 = vunpack.c.l.b16 %v161
    %v739 = vunpack.c.h.b16 %v161
    %v740 = vunpack.c.l.b16 %v162
    %v741 = vunpack.c.h.b16 %v162
    %v742 = vunpack.c.l.b16 %v163
    %v743 = vunpack.c.h.b16 %v163
    %v744 = vunpack.c.l.b16 %v164
    %v745 = vunpack.c.h.b16 %v164
    %v746 = vunpack.c.l.b16 %v165
    %v747 = vunpack.c.h.b16 %v165
    %v748 = vunpack.c.l.b16 %v166
    %v749 = vunpack.c.h.b16 %v166
    %v750 = vunpack.c.l.b16 %v167
    %v751 = vunpack.c.h.b16 %v167
    %v752 = vunpack.c.l.b16 %v168
    %v753 = vunpack.c.h.b16 %v168
    %v754 = vunpack.c.l.b16 %v169
    %v755 = vunpack.c.h.b16 %v169
    %v756 = vunpack.c.l.b16 %v170
    %v757 = vunpack.c.h.b16 %v170
    %v758 = vunpack.c.l.b16 %v171
    %v759 = vunpack.c.h.b16 %v171
    %v760 = vunpack.c.l.b16 %v172
    %v761 = vunpack.c.h.b16 %v172
    %v762 = vunpack.c.l.b16 %v173
    %v763 = vunpack.c.h.b16 %v173
    %v764 = vunpack.c.l.b16 %v174
    %v765 = vunpack.c.h.b16 %v174
    %v766 = vunpack.c.l.b16 %v175
    %v767 = vunpack.c.h.b16 %v175
    %v768 = vunpack.c.l.b16 %v176
    %v769 = vunpack.c.h.b16 %v176
    %v770 = vunpack.c.l.b16 %v177
    %v771 = vunpack.c.h.b16 %v177
    %v772 = vunpack.c.l.b16 %v178
    %v773 = vunpack.c.h.b16 %v178
    %v774 = vunpack.c.l.b16 %v179
    %v775 = vunpack.c.h.b16 %v179
    %v776 = vunpack.c.l.b16 %v180
    %v777 = vunpack.c.h.b16 %v180
    %v778 = vunpack.c.l.b16 %v181
    %v779 = vunpack.c.h.b16 %v181
    %v780 = vunpack.c.l.b16 %v182
    %v781 = vunpack.c.h.b16 %v182
    %v782 = vunpack.c.l.b16 %v183
    %v783 = vunpack.c.h.b16 %v183
    %v784 = vunpack.c.l.b16 %v184
    %v785 = vunpack.c.h.b16 %v184
    %v786 = vunpack.c.l.b16 %v185
    %v787 = vunpack.c.h.b16 %v185
    %v788 = vunpack.c.l.b16 %v186
    %v789 = vunpack.c.h.b16 %v186
    %v790 = vunpack.c.l.b16 %v187
    %v791 = vunpack.c.h.b16 %v187
    %v792 = vunpack.c.l.b16 %v188
    %v793 = vunpack.c.h.b16 %v188
    %v794 = vunpack.c.l.b16 %v189
    %v795 = vunpack.c.h.b16 %v189
    %v796 = vpack.c.b16 %v672, %v668
    %v797 = vpack.c.b16 %v673, %v669
    %v798 = vpack.c.b16 %v674, %v670
    %v799 = vpack.c.b16 %v675, %v671
    %v800 = vpack.c.b16 %v680, %v676
    %v801 = vpack.c.b16 %v681, %v677
    %v802 = vpack.c.b16 %v682, %v678
    %v803 = vpack.c.b16 %v683, %v679
    %v804 = vpack.c.b16 %v688, %v684
    %v805 = vpack.c.b16 %v689, %v685
    %v806 = vpack.c.b16 %v690, %v686
    %v807 = vpack.c.b16 %v691, %v687
    %v808 = vpack.c.b16 %v696, %v692
    %v809 = vpack.c.b16 %v697, %v693
    %v810 = vpack.c.b16 %v698, %v694
    %v811 = vpack.c.b16 %v699, %v695
    %v812 = vpack.c.b16 %v704, %v700
    %v813 = vpack.c.b16 %v705, %v701
    %v814 = vpack.c.b16 %v706, %v702
    %v815 = vpack.c.b16 %v707, %v703
    %v816 = vpack.c.b16 %v712, %v708
    %v817 = vpack.c.b16 %v713, %v709
    %v818 = vpack.c.b16 %v714, %v710
    %v819 = vpack.c.b16 %v715, %v711
    %v820 = vpack.c.b16 %v720, %v716
    %v821 = vpack.c.b16 %v721, %v717
    %v822 = vpack.c.b16 %v722, %v718
    %v823 = vpack.c.b16 %v723, %v719
    %v824 = vpack.c.b16 %v728, %v724
    %v825 = vpack.c.b16 %v729, %v725
    %v826 = vpack.c.b16 %v730, %v726
    %v827 = vpack.c.b16 %v731, %v727
    %v828 = vpack.c.b16 %v736, %v732
    %v829 = vpack.c.b16 %v737, %v733
    %v830 = vpack.c.b16 %v738, %v734
    %v831 = vpack.c.b16 %v739, %v735
    %v832 = vpack.c.b16 %v744, %v740
    %v833 = vpack.c.b16 %v745, %v741
    %v834 = vpack.c.b16 %v746, %v742
    %v835 = vpack.c.b16 %v747, %v743
    %v836 = vpack.c.b16 %v752, %v748
    %v837 = vpack.c.b16 %v753, %v749
    %v838 = vpack.c.b16 %v754, %v750
    %v839 = vpack.c.b16 %v755, %v751
    %v840 = vpack.c.b16 %v760, %v756
    %v841 = vpack.c.b16 %v761, %v757
    %v842 = vpack.c.b16 %v762, %v758
    %v843 = vpack.c.b16 %v763, %v759
    %v844 = vpack.c.b16 %v768, %v764
    %v845 = vpack.c.b16 %v769, %v765
    %v846 = vpack.c.b16 %v770, %v766
    %v847 = vpack.c.b16 %v771, %v767
    %v848 = vpack.c.b16 %v776, %v772
    %v849 = vpack.c.b16 %v777, %v773
    %v850 = vpack.c.b16 %v778, %v774
    %v851 = vpack.c.b16 %v779, %v775
    %v852 = vpack.c.b16 %v784, %v780
    %v853 = vpack.c.b16 %v785, %v781
    %v854 = vpack.c.b16 %v786, %v782
    %v855 = vpack.c.b16 %v787, %v783
    %v856 = vpack.c.b16 %v792, %v788
    %v857 = vpack.c.b16 %v793, %v789
    %v858 = vpack.c.b16 %v794, %v790
    %v859 = vpack.c.b16 %v795, %v791
    %924 = vmatprep.subr.bf16.mxu0 %v825
    %925 = vmatpush1.bf16.msra.mxu0 %v824
    %926 = vmatprep.subr.bf16.mxu0 %v821
    %927 = vmatpush1.bf16.msra.mxu0 %v820
    %928 = vmatprep.subr.bf16.mxu0 %v817
    %929 = vmatpush1.bf16.msra.mxu0 %v816
    %930 = vmatprep.subr.bf16.mxu0 %v813
    %931 = vmatpush1.bf16.msra.mxu0 %v812
    %932 = vmatprep.subr.bf16.mxu0 %v809
    %933 = vmatpush1.bf16.msra.mxu0 %v808
    %934 = vmatprep.subr.bf16.mxu0 %v805
    %935 = vmatpush1.bf16.msra.mxu0 %v804
    %936 = vmatprep.subr.bf16.mxu0 %v801
    %937 = vmatpush1.bf16.msra.mxu0 %v800
    %938 = vmatprep.subr.bf16.mxu0 %v797
    %939 = vmatpush1.bf16.msra.mxu0 %v796
    %940 = vmatprep.subr.bf16.mxu0 %v857
    %941 = vmatpush2.bf16.msra.mxu0 %v856
    %942 = vmatprep.subr.bf16.mxu0 %v853
    %943 = vmatpush2.bf16.msra.mxu0 %v852
    %944 = vmatprep.subr.bf16.mxu0 %v849
    %945 = vmatpush2.bf16.msra.mxu0 %v848
    %946 = vmatprep.subr.bf16.mxu0 %v845
    %947 = vmatpush2.bf16.msra.mxu0 %v844
    %948 = vmatprep.subr.bf16.mxu0 %v841
    %949 = vmatpush2.bf16.msra.mxu0 %v840
    %950 = vmatprep.subr.bf16.mxu0 %v837
    %951 = vmatpush2.bf16.msra.mxu0 %v836
    %952 = vmatprep.subr.bf16.mxu0 %v833
    %953 = vmatpush2.bf16.msra.mxu0 %v832
    %954 = vmatprep.subr.bf16.mxu0 %v829
    %955 = vmatpush2.bf16.msra.mxu0 %v828
    %956 = vmatprep.mubr.bf16.mxu0 %v199
    %957 = vmatmul.mubr.bf16.gmra.mxu0 %v198
    %v958 = vpop.f32.mrf.mxu0
    %v959 = vadd.f32 0.0, %v958
    %v960 = vpop.f32.mrf.mxu0
    %v961 = vadd.f32 0.0, %v960
    %v962 = vpop.f32.mrf.mxu0
    %v963 = vpop.f32.mrf.mxu0
    %964 = vdwg.mxu0
    %965 = vmatprep.subr.bf16.mxu0 %v827
    %966 = vmatpush1.bf16.msra.mxu0 %v826
    %967 = vmatprep.subr.bf16.mxu0 %v823
    %968 = vmatpush1.bf16.msra.mxu0 %v822
    %969 = vmatprep.subr.bf16.mxu0 %v819
    %970 = vmatpush1.bf16.msra.mxu0 %v818
    %971 = vmatprep.subr.bf16.mxu0 %v815
    %972 = vmatpush1.bf16.msra.mxu0 %v814
    %973 = vmatprep.subr.bf16.mxu0 %v811
    %974 = vmatpush1.bf16.msra.mxu0 %v810
    %975 = vmatprep.subr.bf16.mxu0 %v807
    %976 = vmatpush1.bf16.msra.mxu0 %v806
    %977 = vmatprep.subr.bf16.mxu0 %v803
    %978 = vmatpush1.bf16.msra.mxu0 %v802
    %979 = vmatprep.subr.bf16.mxu0 %v799
    %980 = vmatpush1.bf16.msra.mxu0 %v798
    %981 = vmatprep.subr.bf16.mxu0 %v859
    %982 = vmatpush2.bf16.msra.mxu0 %v858
    %983 = vmatprep.subr.bf16.mxu0 %v855
    %984 = vmatpush2.bf16.msra.mxu0 %v854
    %985 = vmatprep.subr.bf16.mxu0 %v851
    %986 = vmatpush2.bf16.msra.mxu0 %v850
    %987 = vmatprep.subr.bf16.mxu0 %v847
    %988 = vmatpush2.bf16.msra.mxu0 %v846
    %989 = vmatprep.subr.bf16.mxu0 %v843
    %990 = vmatpush2.bf16.msra.mxu0 %v842
    %991 = vmatprep.subr.bf16.mxu0 %v839
    %992 = vmatpush2.bf16.msra.mxu0 %v838
    %993 = vmatprep.subr.bf16.mxu0 %v835
    %994 = vmatpush2.bf16.msra.mxu0 %v834
    %995 = vmatprep.subr.bf16.mxu0 %v831
    %996 = vmatpush2.bf16.msra.mxu0 %v830
    %997 = vmatprep.mubr.bf16.mxu0 %v199
    %998 = vmatmul.mubr.bf16.gmra.mxu0 %v198
    %v999 = vpop.f32.mrf.mxu0
    %v1000 = vadd.f32 0.0, %v999
    %v1001 = vpop.f32.mrf.mxu0
    %v1002 = vadd.f32 0.0, %v1001
    %v1003 = vpop.f32.mrf.mxu0
    %v1004 = vpop.f32.mrf.mxu0
    %1005 = vdwg.mxu0
    %v1006 = vld [vmem:[#allocation8] sm:$0xff]
    %v1007 = vunpack.c.l.bf16 %v1006
    %v1008 = vunpack.c.h.bf16 %v1006
    %v1011 = vcombine.high %v1007, %v1007
    %v1012 = vcombine.high %v1008, %v1008
    %v1015 = vmul.f32 %v557, %v1007
    %v1016 = vmul.f32 %v559, %v1011
    %v1017 = vmul.f32 %v598, %v1008
    %v1018 = vmul.f32 %v600, %v1012
    %v1019 = vmul.f32 %v959, %v1007
    %v1020 = vmul.f32 %v961, %v1011
    %v1021 = vmul.f32 %v1000, %v1008
    %v1022 = vmul.f32 %v1002, %v1012
    %vm1023 = vcmask 1043456
    %v1024 = vsel %vm1023, %v1015, 0.0
    %v1025 = vsel %vm1023, %v1016, 0.0
    %v1026 = vadd.f32 %v1024, %v1025
    %v1027 = vsel %vm1023, %v1017, 0.0
    %v1028 = vadd.f32 %v1026, %v1027
    %v1029 = vsel %vm1023, %v1018, 0.0
    %v1030 = vadd.f32 %v1028, %v1029
    %1031 = vadd.xlane.f32.xlu0 %v1030
    %v1032 = vpop.xlane.xlu0 %1031
    %v1033 = vsel %vm1023, %v1019, 0.0
    %v1034 = vsel %vm1023, %v1020, 0.0
    %v1035 = vadd.f32 %v1033, %v1034
    %v1036 = vsel %vm1023, %v1021, 0.0
    %v1037 = vadd.f32 %v1035, %v1036
    %v1038 = vsel %vm1023, %v1022, 0.0
    %v1039 = vadd.f32 %v1037, %v1038
    %1040 = vadd.xlane.f32.xlu0 %v1039
    %v1041 = vpop.xlane.xlu0 %1040
    %v1044 = vlaneseq
    %v1045 = vand.u32 %v1044, 127
    %v1046 = vlaneseq
    %v1047 = vshrl.u32 %v1046, 7
    %v1048 = vsub.s32 %v1045, %v1047
    %v1049 = vrot.slane %v1032, %v1048
    %v1050 = vlaneseq
    %v1051 = vshrl.u32 %v1050, 7
    %v1052 = vsub.s32 %v1045, %v1051
    %v1053 = vrot.slane %v1041, %v1052
    %vm1054 = vcmask 1041409
    %v1055 = vsel %vm1054, %v1053, %v1049
    %vm1057 = vcmask 25600
    %v1058 = vsel %vm1057, %v1055, 0.0
    %1059 = vadd.xlane.f32.xlu0 %v1058
    %v1060 = vpop.xlane.xlu0 %1059
    %v1061 = vld [vmem:[#allocation2] sm:$0x3]
    %v1062 = vadd.f32 %v1061, %v1060
    %vm1063 = vcmask 1024
    %1064 = vst.msk [vmem:[#allocation2] sm:$0x3] %vm1063, %v1062
    // Predicated region
    $region34: #{tpu_custom_call.1} parent=1 // pred_check
      %p1065 = pneg %p56
    $region35: #{tpu_custom_call.1} parent=1 // pred_check_branch
      %1067 = sbr.rel (%p1065) target = $region37
    $region36: #{tpu_custom_call.1} parent=1 // pred_region
      %v1068 = vld [vmem:[#allocation2] sm:$0x3]
      %v1069 = vld [vmem:[#allocation3] sm:$0x1]
      %v1071 = vlaneseq
      %v1072 = vshrl.u32 %v1071, 7
      %v1073 = vsub.s32 0, %v1072
      %v1074 = vrot.slane %v1069, %v1073
      %v1076 = vadd.f32 %v1068, %v1074
      %1077 = vst.msk [vmem:[%s4] sm:$0x3] %vm1063, %v1076
    $region37: #{tpu_custom_call.1} parent=1 // pred_fallthru
      _
    // Predicated region
    $region38: #{tpu_custom_call.1} parent=1 // pred_check
      _
    $region39: #{tpu_custom_call.1} parent=1 // pred_check_branch
      %1079 = sbr.rel (0) target = $region41
    $region40: #{tpu_custom_call.1} parent=1 // pred_region
      _
    $region41: #{tpu_custom_call.1} parent=1 // pred_fallthru
      _
    // Predicated region
    $region42: #{tpu_custom_call.1} parent=1 // pred_check
      _
    $region43: #{tpu_custom_call.1} parent=1 // pred_check_branch
      %1081 = sbr.rel (0) target = $region45
    $region44: #{tpu_custom_call.1} parent=1 // pred_region
      _
    $region45: #{tpu_custom_call.1} parent=1 // pred_fallthru
      _
    %1082 = vsyncpa [#allocation5], 1
    %1083 = vsyncpa [#allocation7], 1

</llo_original>
